<compile_context>
chip_gen: v5e
topology: v5e:2x2
jax: 0.10.0
libtpu: 0.0.40
codegen_flags: <defaults>
</compile_context>

<pallas_src>
import functools
import math
from typing import Any, Callable

import jax
import jax.numpy as jnp
from jax.experimental import pallas as pl
from jax.experimental.pallas import tpu as pltpu

_EPS = 1e-6
_MiB = 1024 * 1024


def _cdiv(a: int, b: int) -> int:
    return -(-a // b)


def _round_up(x: int, m: int) -> int:
    return _cdiv(x, m) * m


def _sublane_packing(dtype) -> int:
    # f32 -> 8, bf16 -> 16, int8/fp8 -> 32 rows per packed sublane group.
    return max(8, 32 // jnp.dtype(dtype).itemsize)


def _device_vmem_bytes() -> int:
    try:
        return int(pltpu.get_tpu_info().vmem_capacity_bytes)
    except Exception:
        # Conservative fallback: v7x has the smallest per-core VMEM (64 MiB).
        return 64 * _MiB


# ----------------------------------------------------------------------------
# Kernels
# ----------------------------------------------------------------------------
def _zscore_fused_kernel(x_ref, o_ref, *, inv_n):
    """Single-pass per-row z-score; block covers the full spatial (lane) axis.

    Trailing partial row blocks may contain garbage rows; their results are
    never stored (Pallas masks the writeback), so no padding is required.
    """
    x = x_ref[...].astype(jnp.float32)
    mean = jnp.sum(x, axis=-1, keepdims=True) * inv_n
    centered = x - mean
    var = jnp.sum(centered * centered, axis=-1, keepdims=True) * inv_n
    o_ref[...] = (centered * jax.lax.rsqrt(var + _EPS)).astype(o_ref.dtype)


def _zscore_packed_kernel(x_ref, o_ref, *, group, cols, inv_n):
    """Lane-packed z-score: each block row holds `group` logical rows of
    length `cols`, so the lane width (group*cols) is a multiple of 128 and the
    output stores stay vreg-dense.  Per-segment stats via masked reductions
    (exact f32 VPU/XLU math, centered variance)."""
    x = x_ref[...].astype(jnp.float32)                    # (bm, group*cols)
    gc = group * cols
    lane = jax.lax.broadcasted_iota(jnp.int32, (1, gc), 1)
    masks = [((lane >= s * cols) & (lane < (s + 1) * cols)).astype(jnp.float32)
             for s in range(group)]                        # static unroll, small

    mean_b = jnp.zeros_like(x)
    for m in masks:
        seg_sum = jnp.sum(x * m, axis=-1, keepdims=True)   # (bm, 1)
        mean_b = mean_b + (seg_sum * inv_n) * m

    centered = x - mean_b
    c2 = centered * centered
    inv_b = jnp.zeros_like(x)
    for m in masks:
        seg_var = jnp.sum(c2 * m, axis=-1, keepdims=True) * inv_n
        inv_b = inv_b + jax.lax.rsqrt(seg_var + _EPS) * m

    o_ref[...] = (centered * inv_b).astype(o_ref.dtype)


def _stats_kernel(x_ref, mean_ref, inv_ref, *, inv_n, cols, col_tile, need_mask):
    """Pass 1 of the split-cols path: accumulate sum / sum_sq over col blocks
    directly in the resident output blocks; finalize to mean / inv_std."""
    k = pl.program_id(1)

    @pl.when(k == 0)
    def _():
        mean_ref[...] = jnp.zeros_like(mean_ref)
        inv_ref[...] = jnp.zeros_like(inv_ref)

    x = x_ref[...].astype(jnp.float32)
    if need_mask:
        lane = jax.lax.broadcasted_iota(jnp.int32, x.shape, 1) + k * col_tile
        x = jnp.where(lane < cols, x, 0.0)
    mean_ref[...] += jnp.sum(x, axis=-1, keepdims=True)
    inv_ref[...] += jnp.sum(x * x, axis=-1, keepdims=True)

    @pl.when(k == pl.num_programs(1) - 1)
    def _():
        m = mean_ref[...] * inv_n
        # TODO(synk): switch to a centered / Welford-style update if this
        # fallback is used on data with |mean| >> std (catastrophic cancel).
        var = jnp.maximum(inv_ref[...] * inv_n - m * m, 0.0)
        mean_ref[...] = m
        inv_ref[...] = jax.lax.rsqrt(var + _EPS)


def _normalize_kernel(x_ref, mean_ref, inv_ref, o_ref):
    """Pass 2 of the split-cols path: apply (x - mean) * inv_std."""
    x = x_ref[...].astype(jnp.float32)
    o_ref[...] = ((x - mean_ref[...]) * inv_ref[...]).astype(o_ref.dtype)


# ----------------------------------------------------------------------------
# Tiling helpers
# ----------------------------------------------------------------------------
def _pick_lane_group(rows: int, cols: int) -> int:
    """How many logical rows to pack into one lane-dense row (group*cols % 128 == 0)."""
    if cols % 128 == 0 or cols > 1024:
        return 1
    g = 128 // math.gcd(cols, 128)
    if 1 < g <= 16 and rows % g == 0:
        return g
    # TODO(synk): handle rows % g != 0 (tail slab) so ragged small-cols cases
    # also get lane-dense packing instead of masked partial stores.
    return 1


def _pick_row_tile(rows: int, per_row_bytes: int, budget: int, packing: int) -> int:
    """Largest sublane-packed row tile fitting the budget; 0 if nothing fits.
    Targets >=4 grid blocks (when possible) so both TensorCores get work."""
    max_rows = budget // max(per_row_bytes, 1)
    if rows <= packing:
        return rows if max_rows >= rows else 0
    max_rows = (max_rows // packing) * packing
    if max_rows < packing:
        return 0
    desired = _round_up(_cdiv(rows, 4), packing)
    return max(packing, min(max_rows, desired))


def _call_fused(x2d, kernel, row_tile: int, vmem_limit: int, donate: bool):
    rows, cols = x2d.shape
    return pl.pallas_call(
        kernel,
        out_shape=jax.ShapeDtypeStruct((rows, cols), x2d.dtype),
        grid=(_cdiv(rows, row_tile),),
        in_specs=[pl.BlockSpec((row_tile, cols), lambda i: (i, 0))],
        out_specs=pl.BlockSpec((row_tile, cols), lambda i: (i, 0)),
        input_output_aliases=({0: 0} if donate else {}),
        compiler_params=pltpu.CompilerParams(
            dimension_semantics=("parallel",),
            vmem_limit_bytes=vmem_limit,
        ),
    )(x2d)


def _split_path(x2d, budget: int, vmem_limit: int, donate: bool):
    """Two-pass fallback for spatial extents too large for a full-width tile."""
    rows, cols = x2d.shape
    dtype = x2d.dtype
    itemsize = jnp.dtype(dtype).itemsize
    packing = _sublane_packing(dtype)

    row_tile = rows if rows <= packing else min(32 * packing, _round_up(rows, packing))
    col_cap = _round_up(cols, 128)
    # Stats pass streams only x (outputs are (rows,1)): give it a bigger tile.
    col_tile_s = min(col_cap, max(128, (budget // (row_tile * (2 * itemsize + 8))) // 128 * 128))
    # Normalize pass double-buffers input + output blocks plus one f32 temp.
    col_tile_n = min(col_cap, max(128, (budget // (row_tile * (4 * itemsize + 4))) // 128 * 128))

    r_blocks = _cdiv(rows, row_tile)
    need_mask = (cols % col_tile_s) != 0

    mean, inv_std = pl.pallas_call(
        functools.partial(_stats_kernel, inv_n=1.0 / cols, cols=cols,
                          col_tile=col_tile_s, need_mask=need_mask),
        out_shape=(
            jax.ShapeDtypeStruct((rows, 1), jnp.float32),
            jax.ShapeDtypeStruct((rows, 1), jnp.float32),
        ),
        grid=(r_blocks, _cdiv(cols, col_tile_s)),
        in_specs=[pl.BlockSpec((row_tile, col_tile_s), lambda i, k: (i, k))],
        out_specs=(
            pl.BlockSpec((row_tile, 1), lambda i, k: (i, 0)),
            pl.BlockSpec((row_tile, 1), lambda i, k: (i, 0)),
        ),
        compiler_params=pltpu.CompilerParams(
            dimension_semantics=("parallel", "arbitrary"),
            vmem_limit_bytes=vmem_limit,
        ),
    )(x2d)

    # TODO(synk): fuse both passes into one (r, phase, c) grid to keep
    # mean/inv_std in VMEM scratch and save one launch/barrier.
    y = pl.pallas_call(
        _normalize_kernel,
        out_shape=jax.ShapeDtypeStruct((rows, cols), dtype),
        grid=(r_blocks, _cdiv(cols, col_tile_n)),
        in_specs=[
            pl.BlockSpec((row_tile, col_tile_n), lambda i, k: (i, k)),
            pl.BlockSpec((row_tile, 1), lambda i, k: (i, 0)),
            pl.BlockSpec((row_tile, 1), lambda i, k: (i, 0)),
        ],
        out_specs=pl.BlockSpec((row_tile, col_tile_n), lambda i, k: (i, k)),
        input_output_aliases=({0: 0} if donate else {}),
        compiler_params=pltpu.CompilerParams(
            dimension_semantics=("parallel", "parallel"),
            vmem_limit_bytes=vmem_limit,
        ),
    )(x2d, mean, inv_std)
    return y


# ----------------------------------------------------------------------------
# Pallas driver: per-row zero-mean / unit-std over a (rows, cols) slab
# ----------------------------------------------------------------------------
def _zscore_pallas(x2d: jnp.ndarray, *, block_budget_bytes: int | None = None,
                   donate: bool = False) -> jnp.ndarray:
    rows, cols = x2d.shape
    dtype = x2d.dtype
    itemsize = jnp.dtype(dtype).itemsize
    packing = _sublane_packing(dtype)

    vmem_cap = _device_vmem_bytes()
    vmem_limit = max(16 * _MiB, min(vmem_cap - 16 * _MiB, 112 * _MiB))
    vmem_limit_hi = max(vmem_limit, min(vmem_cap - 8 * _MiB, 120 * _MiB))
    if block_budget_bytes is not None:
        budget = int(block_budget_bytes)
    else:
        budget = vmem_limit // 2

    # ---- lane-dense repack for small, non-128-multiple spatial extents ----
    group = _pick_lane_group(rows, cols)
    if group > 1:
        x_pk = x2d.reshape(rows // group, group * cols)     # row-major no-op reshape
        per_row = group * cols * (4 * itemsize + 24)        # buffers + packed f32 temps
        rt = _pick_row_tile(rows // group, per_row, budget, packing)
        if rt > 0:
            kern = functools.partial(_zscore_packed_kernel, group=group,
                                     cols=cols, inv_n=1.0 / cols)
            y = _call_fused(x_pk, kern, rt, vmem_limit, donate)
            return y.reshape(rows, cols)
        # otherwise fall through to the unpacked paths below

    # ---- fused single-pass path (full spatial axis per block) ----
    # footprint/row: double-buffered in + out blocks plus ~2 f32 temporaries.
    per_row = cols * (4 * itemsize + 8)
    row_tile = _pick_row_tile(rows, per_row, budget, packing)
    vmem_lim_used = vmem_limit
    if row_tile == 0 and block_budget_bytes is None:
        # v7x-style retry: minimum-height tile, slimmer temp estimate, higher
        # scoped limit; single-pass traffic (1R+1W) beats the 2R+1W fallback.
        per_row_min = cols * (4 * itemsize + 4)
        rt = min(rows, packing)
        if rt * per_row_min <= vmem_limit_hi:
            row_tile = rt
            vmem_lim_used = vmem_limit_hi
    if row_tile > 0:
        kern = functools.partial(_zscore_fused_kernel, inv_n=1.0 / cols)
        return _call_fused(x2d, kern, row_tile, vmem_lim_used, donate)

    # ---- split-cols two-pass fallback (very large H*W for this VMEM) ----
    return _split_path(x2d, budget, vmem_limit, donate)


# ----------------------------------------------------------------------------
# The wrapped transform (the `trafo` callable): NCHW in, NCHW out
# ----------------------------------------------------------------------------
def zscore_transform(x: jnp.ndarray, *, block_budget_bytes: int | None = None,
                     donate: bool = False) -> jnp.ndarray:
    """Per-sample, per-channel zero-mean/unit-std over spatial dims."""
    n, c, h, w = x.shape
    x2d = x.reshape(n * c, h * w)          # glue: reshape only, no compute
    y2d = _zscore_pallas(x2d, block_budget_bytes=block_budget_bytes, donate=donate)
    return y2d.reshape(n, c, h, w)


# ----------------------------------------------------------------------------
# _TransformWrapper: exact forward semantics of the PyTorch module
# ----------------------------------------------------------------------------
class TransformWrapper:
    """JAX equivalent of rising's _TransformWrapper: forwards *args/**kwargs
    to the wrapped (non-module) transform."""

    def __init__(self, trafo: Callable):
        self.trafo = trafo

    def __call__(self, *args, **kwargs) -> Any:
        return self.trafo(*args, **kwargs)

    # alias to mirror nn.Module.forward
    def forward(self, *args, **kwargs) -> Any:
        return self.trafo(*args, **kwargs)


if __name__ == "__main__":
    key = jax.random.PRNGKey(0)
    k1, k2 = jax.random.split(key)

    wrapper = TransformWrapper(zscore_transform)

    def ref_norm(x):
        mean = x.mean(axis=(2, 3), keepdims=True)
        var = ((x - mean) ** 2).mean(axis=(2, 3), keepdims=True)
        return (x - mean) / jnp.sqrt(var + _EPS)

    # 1) fused single-pass path (lane-dense: H*W = 256 = 2*128), no padding.
    x = jax.random.normal(k1, (2, 4, 16, 16), dtype=jnp.float32) * 3.0 + 1.5
    y = jax.block_until_ready(wrapper(x))
    assert y.shape == x.shape and y.dtype == x.dtype
    assert float(jnp.max(jnp.abs(y - ref_norm(x)))) < 1e-4

    # 2) split-cols two-pass fallback, forced via a tiny block budget
    #    (also exercises the wrapper's **kwargs forwarding).
    y_split = jax.block_until_ready(wrapper(x, block_budget_bytes=16 * 1024))
    assert y_split.shape == x.shape and y_split.dtype == x.dtype
    assert float(jnp.max(jnp.abs(y_split - ref_norm(x)))) < 1e-3

    # 3) lane-repacked path: H*W = 96 is not a multiple of 128, so 4 logical
    #    rows are packed per lane row (384-wide, vst-dense output).
    xs = jax.random.normal(k2, (2, 4, 8, 12), dtype=jnp.float32) * 2.0 - 0.5
    ys = jax.block_until_ready(wrapper(xs))
    assert ys.shape == xs.shape and ys.dtype == xs.dtype
    assert float(jnp.max(jnp.abs(ys - ref_norm(xs)))) < 1e-4

    # 4) aliased output buffer (input_output_aliases) on the fused path.
    y_d = jax.block_until_ready(wrapper(x + 0.0, donate=True))
    assert float(jnp.max(jnp.abs(y_d - ref_norm(x)))) < 1e-4

    print("KERNEL_OK")
</pallas_src>

<mosaic_0001>
module attributes {stable_mosaic.version = 11 : i64} {
  func.func @_zscore_fused_kernel(%arg0: i32, %arg1: memref<8x256xf32, #tpu.memory_space<vmem>>, %arg2: memref<8x256xf32, #tpu.memory_space<vmem>>) attributes {dimension_semantics = [#tpu.dimension_semantics<parallel>], iteration_bounds = array<i64: 1>, scalar_prefetch = 0 : i64, scratch_operands = 0 : i64, tpu.core_type = #tpu.core_type<tc>, window_params = [{transform_indices = @transform_0, window_bounds = array<i64: 8, 256>}, {transform_indices = @transform_1, window_bounds = array<i64: 8, 256>}]} {
    %c0 = arith.constant 0 : index
    %c0_0 = arith.constant 0 : index
    %0 = vector.load %arg1[%c0, %c0_0] : memref<8x256xf32, #tpu.memory_space<vmem>>, vector<8x256xf32>
    %cst = arith.constant dense<0.000000e+00> : vector<8xf32>
    %1 = vector.multi_reduction <add>, %0, %cst [1] : vector<8x256xf32> to vector<8xf32>
    %2 = vector.shape_cast %1 : vector<8xf32> to vector<8x1xf32>
    %cst_1 = arith.constant 3.906250e-03 : f32
    %3 = vector.broadcast %cst_1 : f32 to vector<8x1xf32>
    %4 = arith.mulf %2, %3 : vector<8x1xf32>
    %5 = vector.broadcast %4 : vector<8x1xf32> to vector<8x256xf32>
    %6 = arith.subf %0, %5 : vector<8x256xf32>
    %7 = arith.mulf %6, %6 : vector<8x256xf32>
    %cst_2 = arith.constant dense<0.000000e+00> : vector<8xf32>
    %8 = vector.multi_reduction <add>, %7, %cst_2 [1] : vector<8x256xf32> to vector<8xf32>
    %9 = vector.shape_cast %8 : vector<8xf32> to vector<8x1xf32>
    %cst_3 = arith.constant 3.906250e-03 : f32
    %10 = vector.broadcast %cst_3 : f32 to vector<8x1xf32>
    %11 = arith.mulf %9, %10 : vector<8x1xf32>
    %cst_4 = arith.constant 9.99999997E-7 : f32
    %12 = vector.broadcast %cst_4 : f32 to vector<8x1xf32>
    %13 = arith.addf %11, %12 : vector<8x1xf32>
    %14 = math.rsqrt %13 : vector<8x1xf32>
    %15 = vector.broadcast %14 : vector<8x1xf32> to vector<8x256xf32>
    %16 = arith.mulf %6, %15 : vector<8x256xf32>
    %c0_5 = arith.constant 0 : index
    %c0_6 = arith.constant 0 : index
    %17 = vector.load %arg2[%c0_5, %c0_6] : memref<8x256xf32, #tpu.memory_space<vmem>>, vector<8x256xf32>
    tpu.vector_store %arg2[%c0_5, %c0_6], %16 {strides = array<i32>} : memref<8x256xf32, #tpu.memory_space<vmem>>, vector<8x256xf32>,
    return
  }
  func.func @transform_0(%arg0: i32) -> (i32, i32) {
    %c0_i32 = arith.constant 0 : i32
    %c0_i32_0 = arith.constant 0 : i32
    return %arg0, %c0_i32 : i32, i32
  }
  func.func @transform_1(%arg0: i32) -> (i32, i32) {
    %c0_i32 = arith.constant 0 : i32
    %c0_i32_0 = arith.constant 0 : i32
    return %arg0, %c0_i32 : i32, i32
  }
}

</mosaic_0001>

<llo_original>
// kernel: tpu_custom_call.1
$region0: #{tpu_custom_call.1}
  #allocation0 [shape = 'u32[]', space=smem, size = 0x4, offset = 0x4, fixed_abs, tag = 'smem constant byte address 0x4 - core index']
  #allocation1 [shape = 'u32[72,128]{1,0:T(1,128)}', space=vmem, size = 0x9000, scoped, tag = 'internal scratch']
  %s0 = inlined_call_operand.hbm [shape: f32[8,256], index: 0, kind: input, shape index: {}]
  %s1 = inlined_call_operand.hbm [shape: f32[8,256], index: 1, kind: output, shape index: {}]
  %s2 = sld [smem:[#allocation0]]
  $region18: #{tpu_custom_call.1} parent=0
    _
  %s4 = ssub.s32 1, %s2
  %s5 = scalar_select 0, %s4, %s2
  $region1: #{tpu_custom_call.1} parent=0
    #allocation2 [shape = 'u8[8192]{0}', space=vmem, size = 0x2000, scoped, tag = 'input window, operand 0, single buffered']
    #allocation3 [shape = 's32[1]{0}', space=sflag, size = 0x4, scoped, tag = 'scoped memory for tpu_custom_call.1']
    #allocation4 [shape = 's32[1]{0}', space=sflag, size = 0x4, scoped, tag = 'scoped memory for tpu_custom_call.1']
    #allocation5 [shape = 'u8[8192]{0}', space=vmem, size = 0x2000, scoped, tag = 'output window, operand 0, single buffered']
    %6 = vsyncpa [#allocation3], 0
    %7 = vsyncpa [#allocation4], 0
    // Predicated region
    $region2: #{tpu_custom_call.1} parent=1 // pred_check
      _
    $region3: #{tpu_custom_call.1} parent=1 // pred_check_branch
      %9 = sbr.rel (0) target = $region5
    $region4: #{tpu_custom_call.1} parent=1 // pred_region
      %11 = vsyncadd [#allocation3], 0
      %s13 = sshll.u32 %s0, 4
      %s14 = int_to_ptr.hbm [resolvable:$true] %s13
      %s15 = sshll.u32 [#allocation2], 4
      %s16 = int_to_ptr.vmem [resolvable:$true] %s15
      %18 = dma.hbm_to_vmem [thread:$0]  %s14, 256, %s16, [#allocation3]
    $region5: #{tpu_custom_call.1} parent=1 // pred_fallthru
      _
    // Predicated region
    $region6: #{tpu_custom_call.1} parent=1 // pred_check
      _
    $region7: #{tpu_custom_call.1} parent=1 // pred_check_branch
      %20 = sbr.rel (0) target = $region9
    $region8: #{tpu_custom_call.1} parent=1 // pred_region
      %22 = dma.done [#allocation3], 256
    $region9: #{tpu_custom_call.1} parent=1 // pred_fallthru
      _
    %v23 = vld [vmem:[#allocation2] sm:$0xff]
    %v24 = vld [vmem:[#allocation2 + $0x8] sm:$0xff]
    %v25 = vadd.f32 %v23, %v24
    %26 = vadd.xlane.f32.xlu0 %v25
    %v27 = vpop.xlane.xlu0 %26
    %v28 = vmul.f32 %v27, 0.00390625
    %v29 = vsub.f32 %v23, %v28
    %v30 = vsub.f32 %v24, %v28
    %v31 = vmul.f32 %v29, %v29
    %v32 = vmul.f32 %v30, %v30
    %v33 = vadd.f32 %v31, %v32
    %34 = vadd.xlane.f32.xlu0 %v33
    %v35 = vpop.xlane.xlu0 %34
    %v36 = vmul.f32 %v35, 0.00390625
    %v37 = vadd.f32 %v36, 1e-06
    %v38 = vrsqrt.pop %v37
    %v39 = vmul.f32 %v38, %v37
    %v40 = vmul.f32 %v39, %v38
    %v41 = vmul.f32 0.5, %v40
    %v42 = vsub.f32 1.5, %v41
    %v43 = vmul.f32 %v38, %v42
    %vm44 = vweird.f32 %v37
    %vm45 = vweird.f32 %v38
    %vm46 = vmor %vm44, %vm45
    %v47 = vsel %vm46, %v38, %v43
    %v48 = vmul.f32 %v29, %v47
    %v49 = vmul.f32 %v30, %v47
    %50 = vst [vmem:[#allocation5] sm:$0xff] %v48
    %51 = vst [vmem:[#allocation5 + $0x8] sm:$0xff] %v49
    // Predicated region
    $region10: #{tpu_custom_call.1} parent=1 // pred_check
      _
    $region11: #{tpu_custom_call.1} parent=1 // pred_check_branch
      %53 = sbr.rel (0) target = $region13
    $region12: #{tpu_custom_call.1} parent=1 // pred_region
      %55 = vsyncadd [#allocation4], 0
      %s57 = sshll.u32 [#allocation5], 4
      %s58 = int_to_ptr.vmem [resolvable:$true] %s57
      %s59 = sshll.u32 %s1, 4
      %s60 = int_to_ptr.hbm [resolvable:$true] %s59
      %62 = dma.vmem_to_hbm [thread:$0]  %s58, 256, %s60, [#allocation4]
    $region13: #{tpu_custom_call.1} parent=1 // pred_fallthru
      _
    // Predicated region
    $region14: #{tpu_custom_call.1} parent=1 // pred_check
      _
    $region15: #{tpu_custom_call.1} parent=1 // pred_check_branch
      %64 = sbr.rel (0) target = $region17
    $region16: #{tpu_custom_call.1} parent=1 // pred_region
      %66 = dma.done [#allocation4], 256
    $region17: #{tpu_custom_call.1} parent=1 // pred_fallthru
      _
    %67 = vsyncpa [#allocation3], 1
    %68 = vsyncpa [#allocation4], 1

</llo_original>
